<compile_context>
chip_gen: v5e
topology: v5e:2x2
jax: 0.10.0
libtpu: 0.0.40
codegen_flags: <defaults>
</compile_context>

<pallas_src>
import jax
import jax.numpy as jnp
from jax.experimental import pallas as pl
from jax.experimental.pallas import tpu as pltpu

_LANE_CANDIDATES = (1024, 512, 256, 128)   # lane width of the flattened slab
_MIN_PALLAS_ELEMS = 1 << 20                # below ~1M elems, let XLA fuse the op


def _sublane_align(dtype) -> int:
    # f32 -> 8, bf16/f16 -> 16, int8/fp8 -> 32 (packed-sublane multiples).
    bits = jnp.dtype(dtype).itemsize * 8
    return max(8, 256 // bits)


def _vmem_budget() -> tuple[int, int]:
    """Returns (per-buffer tile bytes, vmem_limit_bytes) per TPU generation."""
    phys = 64 * 1024 * 1024
    try:
        phys = int(getattr(pltpu.get_tpu_info(), "vmem_capacity_bytes", phys))
    except Exception:
        pass
    if phys >= 96 * 1024 * 1024:            # v5e / v6e: 128 MiB physical VMEM
        return 8 * 1024 * 1024, 64 * 1024 * 1024
    # v7x: 64 MiB per TensorCore -> smaller tiles, tighter scoped limit.
    return 4 * 1024 * 1024, 48 * 1024 * 1024


def _linear_dynamics_kernel(t_ref, x_ref, v_ref, o_ref):
    # t_ref: (1,) float32 scalar in SMEM; x/v/o: (tm, C) VMEM tiles.
    t = t_ref[0]
    x = x_ref[...].astype(jnp.float32)
    v = v_ref[...].astype(jnp.float32)
    o_ref[...] = (x + v * t).astype(o_ref.dtype)


def _xla_fallback(x, v, t32):
    out = x.astype(jnp.float32) + v.astype(jnp.float32) * t32[0]
    return out.astype(x.dtype)


def linear_dynamics(x: jax.Array, v: jax.Array, time,
                    *, tile_rows: int | None = None,
                    min_pallas_elems: int = _MIN_PALLAS_ELEMS,
                    donate_x: bool = False) -> jax.Array:
    """out = x + v * time  (time is a length-1 f32 parameter, as in the module)."""
    assert x.shape == v.shape and x.dtype == v.dtype
    orig_shape = x.shape
    total = int(x.size)
    t32 = jnp.asarray(time, dtype=jnp.float32).reshape(1)

    if total == 0:
        return x

    # Small inputs: a standalone pallas_call is pure launch overhead; XLA's
    # fused elementwise is already at the HBM roofline for this op.
    if total < min_pallas_elems:
        return _xla_fallback(x, v, t32).reshape(orig_shape)

    # Lane-dense slab: [rows, C] with C the largest multiple of 128 dividing
    # the element count.  Ragged totals go to XLA: padding the inputs and
    # slicing the output would add ~2-3x extra HBM traffic.
    lane_c = next((c for c in _LANE_CANDIDATES if total % c == 0), None)
    if lane_c is None:
        return _xla_fallback(x, v, t32).reshape(orig_shape)

    rows = total // lane_c
    x2 = x.reshape(rows, lane_c)
    v2 = v.reshape(rows, lane_c)

    itemsize = jnp.dtype(x.dtype).itemsize
    align = _sublane_align(x.dtype)
    per_buffer_bytes, vmem_limit = _vmem_budget()

    if tile_rows is None:
        tile_rows = max(align, per_buffer_bytes // (lane_c * itemsize))
    tm = max(1, min(int(tile_rows), rows))
    if tm < rows:
        tm = max(align, (tm // align) * align)     # dtype-aware sublane alignment
    # Keep >= 2 grid steps when possible so v7x's two TensorCores both pull on
    # the DMA-bound stream (harmless on single-TC v5e/v6e: it just pipelines).
    if tm >= rows and rows >= 2 * align:
        tm = min(rows, align * pl.cdiv(pl.cdiv(rows, 2), align))
    grid = (pl.cdiv(rows, tm),)

    out2 = pl.pallas_call(
        _linear_dynamics_kernel,
        out_shape=jax.ShapeDtypeStruct((rows, lane_c), x.dtype),
        grid=grid,
        in_specs=[
            pl.BlockSpec(memory_space=pltpu.SMEM),             # time scalar (f32)
            pl.BlockSpec((tm, lane_c), lambda i: (i, 0)),      # x tile
            pl.BlockSpec((tm, lane_c), lambda i: (i, 0)),      # v tile
        ],
        out_specs=pl.BlockSpec((tm, lane_c), lambda i: (i, 0)),
        compiler_params=pltpu.CompilerParams(
            dimension_semantics=("parallel",),
            vmem_limit_bytes=vmem_limit,
        ),
        # Saves an HBM allocation (footprint), not bandwidth; never padded here.
        input_output_aliases=({1: 0} if donate_x else {}),
    )(t32, x2, v2)

    return out2.reshape(orig_shape)


if __name__ == "__main__":
    key = jax.random.PRNGKey(0)
    t_ones = jnp.ones((1,), dtype=jnp.float32)       # matches nn.Parameter(torch.ones(1))
    t_other = jnp.array([0.73], dtype=jnp.float32)   # non-trivial time value

    # Case 1: tiny EGNO-like shape -> small-input fallback (XLA fuses it).
    k1, k2 = jax.random.split(key)
    x1 = jax.random.normal(k1, (2, 8, 3), dtype=jnp.float32)
    v1 = jax.random.normal(k2, (2, 8, 3), dtype=jnp.float32)
    o1 = jax.block_until_ready(linear_dynamics(x1, v1, t_ones))
    assert o1.shape == x1.shape
    assert jnp.allclose(o1, x1 + v1 * t_ones[0], atol=1e-6)

    # Case 2: Pallas path (forced via min_pallas_elems=0), multi-block grid
    # with a partial last block: total=24576 -> rows=24, tm=16 -> grid=(2,).
    k3, k4 = jax.random.split(jax.random.fold_in(key, 1))
    x2 = jax.random.normal(k3, (3, 2048, 4), dtype=jnp.float32)
    v2 = jax.random.normal(k4, (3, 2048, 4), dtype=jnp.float32)
    o2 = jax.block_until_ready(
        linear_dynamics(x2, v2, t_other, min_pallas_elems=0, tile_rows=16))
    assert o2.shape == x2.shape
    assert jnp.allclose(o2, x2 + v2 * t_other[0], atol=1e-6)

    # Case 3: Pallas path with bf16 inputs (dtype-aware sublane alignment).
    k5, k6 = jax.random.split(jax.random.fold_in(key, 2))
    x3 = jax.random.normal(k5, (2, 4096, 4), dtype=jnp.bfloat16)
    v3 = jax.random.normal(k6, (2, 4096, 4), dtype=jnp.bfloat16)
    o3 = jax.block_until_ready(
        linear_dynamics(x3, v3, t_other, min_pallas_elems=0, tile_rows=16))
    ref3 = (x3.astype(jnp.float32) + v3.astype(jnp.float32) * t_other[0]).astype(jnp.bfloat16)
    assert o3.shape == x3.shape
    assert jnp.allclose(o3.astype(jnp.float32), ref3.astype(jnp.float32), atol=2e-2)

    # Case 4: Pallas path with default (generation-aware) tiling; the >=2-step
    # logic splits rows across two grid steps.
    k7, k8 = jax.random.split(jax.random.fold_in(key, 3))
    x4 = jax.random.normal(k7, (4, 2048, 16), dtype=jnp.float32)
    v4 = jax.random.normal(k8, (4, 2048, 16), dtype=jnp.float32)
    o4 = jax.block_until_ready(linear_dynamics(x4, v4, t_ones, min_pallas_elems=0))
    assert o4.shape == x4.shape
    assert jnp.allclose(o4, x4 + v4 * t_ones[0], atol=1e-6)

    print("KERNEL_OK")
</pallas_src>

<mosaic_0001>
module attributes {stable_mosaic.version = 11 : i64} {
  func.func @_linear_dynamics_kernel(%arg0: i32, %arg1: memref<1xf32, #tpu.memory_space<smem>>, %arg2: memref<16x1024xf32, #tpu.memory_space<vmem>>, %arg3: memref<16x1024xf32, #tpu.memory_space<vmem>>, %arg4: memref<16x1024xf32, #tpu.memory_space<vmem>>) attributes {dimension_semantics = [#tpu.dimension_semantics<parallel>], iteration_bounds = array<i64: 2>, scalar_prefetch = 0 : i64, scratch_operands = 0 : i64, tpu.core_type = #tpu.core_type<tc>, window_params = [{transform_indices = @transform_0, window_bounds = array<i64: 1>}, {transform_indices = @transform_1, window_bounds = array<i64: 16, 1024>}, {transform_indices = @transform_2, window_bounds = array<i64: 16, 1024>}, {transform_indices = @transform_3, window_bounds = array<i64: 16, 1024>}]} {
    %c0 = arith.constant 0 : index
    %0 = memref.load %arg1[%c0] : memref<1xf32, #tpu.memory_space<smem>>
    %c0_0 = arith.constant 0 : index
    %c0_1 = arith.constant 0 : index
    %1 = vector.load %arg2[%c0_0, %c0_1] : memref<16x1024xf32, #tpu.memory_space<vmem>>, vector<16x1024xf32>
    %c0_2 = arith.constant 0 : index
    %c0_3 = arith.constant 0 : index
    %2 = vector.load %arg3[%c0_2, %c0_3] : memref<16x1024xf32, #tpu.memory_space<vmem>>, vector<16x1024xf32>
    %3 = vector.broadcast %0 : f32 to vector<16x1024xf32>
    %4 = arith.mulf %2, %3 : vector<16x1024xf32>
    %5 = arith.addf %1, %4 : vector<16x1024xf32>
    %c0_4 = arith.constant 0 : index
    %c0_5 = arith.constant 0 : index
    %6 = vector.load %arg4[%c0_4, %c0_5] : memref<16x1024xf32, #tpu.memory_space<vmem>>, vector<16x1024xf32>
    tpu.vector_store %arg4[%c0_4, %c0_5], %5 {strides = array<i32>} : memref<16x1024xf32, #tpu.memory_space<vmem>>, vector<16x1024xf32>,
    return
  }
  func.func @transform_0(%arg0: i32) -> i32 {
    %c0_i32 = arith.constant 0 : i32
    %c0_i32_0 = arith.constant 0 : i32
    return %c0_i32 : i32
  }
  func.func @transform_1(%arg0: i32) -> (i32, i32) {
    %c0_i32 = arith.constant 0 : i32
    %c0_i32_0 = arith.constant 0 : i32
    return %arg0, %c0_i32 : i32, i32
  }
  func.func @transform_2(%arg0: i32) -> (i32, i32) {
    %c0_i32 = arith.constant 0 : i32
    %c0_i32_0 = arith.constant 0 : i32
    return %arg0, %c0_i32 : i32, i32
  }
  func.func @transform_3(%arg0: i32) -> (i32, i32) {
    %c0_i32 = arith.constant 0 : i32
    %c0_i32_0 = arith.constant 0 : i32
    return %arg0, %c0_i32 : i32, i32
  }
}

</mosaic_0001>

<llo_original>
// kernel: tpu_custom_call.1
$region0: #{tpu_custom_call.1}
  #allocation0 [shape = 'u32[]', space=smem, size = 0x4, offset = 0x4, fixed_abs, tag = 'smem constant byte address 0x4 - core index']
  #allocation1 [shape = 'u32[72,128]{1,0:T(1,128)}', space=vmem, size = 0x9000, scoped, tag = 'internal scratch']
  #allocation2 [shape = 'f32[1]{0:T(128)S(6)}', space=smem, size = 0x200, scoped, tag = 'scoped memory for tpu_custom_call.1']
  %s0 = inlined_call_operand.<no memory space> [shape: f32[1], index: 0, kind: input, shape index: {}]
  %s1 = inlined_call_operand.hbm [shape: f32[24,1024], index: 1, kind: input, shape index: {}]
  %s2 = inlined_call_operand.hbm [shape: f32[24,1024], index: 2, kind: input, shape index: {}]
  %s3 = inlined_call_operand.hbm [shape: f32[24,1024], index: 3, kind: output, shape index: {}]
  %s4 = sld [smem:[#allocation0]]
  $region53: #{tpu_custom_call.1} parent=0
    _
  %s6 = ssub.s32 1, %s4
  %s7 = scalar_select 0, %s6, %s4
  %8 = sst [smem:[#allocation2]] %s0
  $region1: #{tpu_custom_call.1} parent=0
    #allocation3 [shape = 'u8[131072]{0}', space=vmem, size = 0x20000, scoped, tag = 'input window, operand 1']
    #allocation4 [shape = 's32[2]{0}', space=sflag, size = 0x8, scoped, tag = 'scoped memory for tpu_custom_call.1']
    #allocation5 [shape = 's32[2]{0}', space=sflag, size = 0x8, scoped, tag = 'scoped memory for tpu_custom_call.1']
    #allocation6 [shape = 'u8[131072]{0}', space=vmem, size = 0x20000, scoped, tag = 'input window, operand 2']
    #allocation7 [shape = 's32[2]{0}', space=sflag, size = 0x8, scoped, tag = 'scoped memory for tpu_custom_call.1']
    #allocation8 [shape = 'u8[131072]{0}', space=vmem, size = 0x20000, scoped, tag = 'output window, operand 0']
    %9 = vsyncpa [#allocation4], 0
    %s10 = scalar_lea.sflag [#allocation4], 1
    %11 = vsyncpa %s10, 0
    %12 = vsyncpa [#allocation7], 0
    %s13 = scalar_lea.sflag [#allocation7], 1
    %14 = vsyncpa %s13, 0
    %15 = vsyncpa [#allocation5], 0
    %s16 = scalar_lea.sflag [#allocation5], 1
    %17 = vsyncpa %s16, 0
    loop: start=0, step=1, limit=4
    $region2: #{tpu_custom_call.1} parent=1 // loop_pre_header
      _
    $region3: #{tpu_custom_call.1} parent=1 // loop_header
      %s19 = sphi 0, %s23
      %p20 = scmp.ge.s32.totalorder %s19, 4
      %s27 = sphi 0, %s27
      %s29 = sphi 0, %s27
      %s30 = sphi 0, %s29
      %s44 = sphi 0, %s30
      %s50 = sphi 0, %s52
      %s53 = sphi 0, %s50
      %s54 = sphi 0, %s53
      %s70 = sphi 0, %s54
      %s76 = sphi 0, %s78
      %s79 = sphi 0, %s76
      %s80 = sphi 0, %s79
      %s96 = sphi 0, %s80
      %s102 = sphi 0, %s104
      %s105 = sphi 0, %s102
      %s106 = sphi 0, %s105
      %s122 = sphi 0, %s106
    $region4: #{tpu_custom_call.1} parent=1 // loop_header_branch
      %22 = sbr.rel (%p20) target = $region8
    $region5: #{tpu_custom_call.1} parent=1 // loop_body
      %s24 = ssub.s32 %s19, 1
      %s25 = ssub.s32 %s19, 2
      %s26 = sadd.s32 %s19, 1
      %s28 = sadd.s32 %s27, 1
      %p31 = scmp.eq.s32.totalorder %s19, 1
      %p32 = scmp.ne.s32.totalorder %s27, %s29
      %p33 = scmp.eq.s32.totalorder %s19, 0
      %p34 = por %p32, %p33
      %p35 = scmp.ne.s32.totalorder %s27, %s29
      %p36 = scmp.eq.s32.totalorder %s24, 1
      %p37 = por %p35, %p36
      %p38 = scmp.ne.s32.totalorder %s29, %s30
      %p39 = scmp.eq.s32.totalorder %s24, 0
      %p40 = por %p38, %p39
      %p41 = scmp.ne.s32.totalorder %s29, %s30
      %p42 = scmp.eq.s32.totalorder %s25, 1
      %p43 = por %p41, %p42
      %p45 = scmp.ne.s32.totalorder %s30, %s44
      %p46 = scmp.eq.s32.totalorder %s25, 0
      %p47 = por %p45, %p46
      %s48 = ssub.s32 %s19, %s26
      %p49 = scmp.eq.s32.totalorder %s48, 0
      %s51 = sadd.s32 %s50, 1
      %s52 = scalar_select %p49, %s50, %s51
      %p55 = pneg %p49
      %p56 = scmp.eq.s32.totalorder %s19, 1
      %p57 = por %p55, %p56
      %p58 = scmp.ne.s32.totalorder %s50, %s53
      %p59 = scmp.eq.s32.totalorder %s19, 0
      %p60 = por %p58, %p59
      %p61 = scmp.ne.s32.totalorder %s50, %s53
      %p62 = scmp.eq.s32.totalorder %s24, 1
      %p63 = por %p61, %p62
      %p64 = scmp.ne.s32.totalorder %s53, %s54
      %p65 = scmp.eq.s32.totalorder %s24, 0
      %p66 = por %p64, %p65
      %p67 = scmp.ne.s32.totalorder %s53, %s54
      %p68 = scmp.eq.s32.totalorder %s25, 1
      %p69 = por %p67, %p68
      %p71 = scmp.ne.s32.totalorder %s54, %s70
      %p72 = scmp.eq.s32.totalorder %s25, 0
      %p73 = por %p71, %p72
      %s74 = ssub.s32 %s19, %s26
      %p75 = scmp.eq.s32.totalorder %s74, 0
      %s77 = sadd.s32 %s76, 1
      %s78 = scalar_select %p75, %s76, %s77
      %p81 = pneg %p75
      %p82 = scmp.eq.s32.totalorder %s19, 1
      %p83 = por %p81, %p82
      %p84 = scmp.ne.s32.totalorder %s76, %s79
      %p85 = scmp.eq.s32.totalorder %s19, 0
      %p86 = por %p84, %p85
      %p87 = scmp.ne.s32.totalorder %s76, %s79
      %p88 = scmp.eq.s32.totalorder %s24, 1
      %p89 = por %p87, %p88
      %p90 = scmp.ne.s32.totalorder %s79, %s80
      %p91 = scmp.eq.s32.totalorder %s24, 0
      %p92 = por %p90, %p91
      %p93 = scmp.ne.s32.totalorder %s79, %s80
      %p94 = scmp.eq.s32.totalorder %s25, 1
      %p95 = por %p93, %p94
      %p97 = scmp.ne.s32.totalorder %s80, %s96
      %p98 = scmp.eq.s32.totalorder %s25, 0
      %p99 = por %p97, %p98
      %s100 = ssub.s32 %s19, %s26
      %p101 = scmp.eq.s32.totalorder %s100, 0
      %s103 = sadd.s32 %s102, 1
      %s104 = scalar_select %p101, %s102, %s103
      %p107 = pneg %p101
      %p108 = scmp.eq.s32.totalorder %s19, 1
      %p109 = por %p107, %p108
      %p110 = scmp.ne.s32.totalorder %s102, %s105
      %p111 = scmp.eq.s32.totalorder %s19, 0
      %p112 = por %p110, %p111
      %p113 = scmp.ne.s32.totalorder %s102, %s105
      %p114 = scmp.eq.s32.totalorder %s24, 1
      %p115 = por %p113, %p114
      %p116 = scmp.ne.s32.totalorder %s105, %s106
      %p117 = scmp.eq.s32.totalorder %s24, 0
      %p118 = por %p116, %p117
      %p119 = scmp.ne.s32.totalorder %s105, %s106
      %p120 = scmp.eq.s32.totalorder %s25, 1
      %p121 = por %p119, %p120
      %p123 = scmp.ne.s32.totalorder %s106, %s122
      %p124 = scmp.eq.s32.totalorder %s25, 0
      %p125 = por %p123, %p124
      %p126 = scmp.le.s32.totalorder 1, %s19
      %p127 = scmp.lt.s32.totalorder %s19, 3
      %p128 = pnand %p126, %p127
      %p129 = pneg %p128
      // Predicated region
      $region9: #{tpu_custom_call.1} parent=5 // pred_check
        _
      $region10: #{tpu_custom_call.1} parent=5 // pred_check_branch
        %131 = sbr.rel (%p128) target = $region12
      $region11: #{tpu_custom_call.1} parent=5 // pred_region
        %s132 = ssub.s32 %s19, 1
        // Predicated region
        $region13: #{tpu_custom_call.1} parent=11 // pred_check
          %p133 = pneg %p40
        $region14: #{tpu_custom_call.1} parent=11 // pred_check_branch
          %135 = sbr.rel (%p133) target = $region16
        $region15: #{tpu_custom_call.1} parent=11 // pred_region
          _
        $region16: #{tpu_custom_call.1} parent=11 // pred_fallthru
          _
      $region12: #{tpu_custom_call.1} parent=5 // pred_fallthru
        _
      %p136 = scmp.lt.s32.totalorder %s19, 2
      // Predicated region
      $region17: #{tpu_custom_call.1} parent=5 // pred_check
        %p137 = pneg %p136
      $region18: #{tpu_custom_call.1} parent=5 // pred_check_branch
        %139 = sbr.rel (%p137) target = $region20
      $region19: #{tpu_custom_call.1} parent=5 // pred_region
        // Predicated region
        $region21: #{tpu_custom_call.1} parent=19 // pred_check
          %p140 = pneg %p60
        $region22: #{tpu_custom_call.1} parent=19 // pred_check_branch
          %142 = sbr.rel (%p140) target = $region24
        $region23: #{tpu_custom_call.1} parent=19 // pred_region
          %s143 = sand.u32 %s50, 1
          %s144 = scalar_lea.sflag [#allocation4], %s143
          %s145 = sand.u32 %s50, 1
          %s146 = smul.addr %s145, 128
          %s147 = scalar_lea.vmem [#allocation3], %s146
          %s148 = smul.u32 2, %s19
          %s149 = ssub.s32 3, %s148
          %p150 = scmp.lt.s32.totalorder %s149, 2
          %s151 = scalar_select %p150, %s149, 2
          %s152 = smul.u32 8, %s151
          %s153 = smul.u32 %s152, 8
          %s154 = ssub.s32 128, %s153
          %s155 = sshll.u32 %s154, 4
          %156 = vsyncadd %s144, %s155
          %p157 = scmp.ne.s32.totalorder 0, %s153
          %s158 = smul.addr %s148, 8
          %s159 = smul.addr %s158, 8
          %s160 = scalar_lea.hbm %s1, %s159
          %s161 = smul.u32 64, %s151
          %s162 = sshll.u32 %s160, 4
          %s163 = int_to_ptr.hbm [resolvable:$true] %s162
          %s164 = sshll.u32 %s147, 4
          %s165 = int_to_ptr.vmem [resolvable:$true] %s164
          %s166 = sshll.u32 %s161, 4
          %170 = dma.hbm_to_vmem [thread:$0]  (%p157), %s163, %s166, %s165, %s144, 1024, 1024, 64
        $region24: #{tpu_custom_call.1} parent=19 // pred_fallthru
          _
        // Predicated region
        $region25: #{tpu_custom_call.1} parent=19 // pred_check
          %p171 = pneg %p86
        $region26: #{tpu_custom_call.1} parent=19 // pred_check_branch
          %173 = sbr.rel (%p171) target = $region28
        $region27: #{tpu_custom_call.1} parent=19 // pred_region
          %s174 = sand.u32 %s76, 1
          %s175 = scalar_lea.sflag [#allocation7], %s174
          %s176 = sand.u32 %s76, 1
          %s177 = smul.addr %s176, 128
          %s178 = scalar_lea.vmem [#allocation6], %s177
          %s179 = smul.u32 2, %s19
          %s180 = ssub.s32 3, %s179
          %p181 = scmp.lt.s32.totalorder %s180, 2
          %s182 = scalar_select %p181, %s180, 2
          %s183 = smul.u32 8, %s182
          %s184 = smul.u32 %s183, 8
          %s185 = ssub.s32 128, %s184
          %s186 = sshll.u32 %s185, 4
          %187 = vsyncadd %s175, %s186
          %p188 = scmp.ne.s32.totalorder 0, %s184
          %s189 = smul.addr %s179, 8
          %s190 = smul.addr %s189, 8
          %s191 = scalar_lea.hbm %s2, %s190
          %s192 = smul.u32 64, %s182
          %s193 = sshll.u32 %s191, 4
          %s194 = int_to_ptr.hbm [resolvable:$true] %s193
          %s195 = sshll.u32 %s178, 4
          %s196 = int_to_ptr.vmem [resolvable:$true] %s195
          %s197 = sshll.u32 %s192, 4
          %201 = dma.hbm_to_vmem [thread:$0]  (%p188), %s194, %s197, %s196, %s175, 1024, 1024, 64
        $region28: #{tpu_custom_call.1} parent=19 // pred_fallthru
          _
      $region20: #{tpu_custom_call.1} parent=5 // pred_fallthru
        _
      %p202 = scmp.le.s32.totalorder 1, %s19
      %p203 = scmp.lt.s32.totalorder %s19, 3
      %p204 = pnand %p202, %p203
      %p205 = pneg %p204
      // Predicated region
      $region29: #{tpu_custom_call.1} parent=5 // pred_check
        _
      $region30: #{tpu_custom_call.1} parent=5 // pred_check_branch
        %207 = sbr.rel (%p204) target = $region32
      $region31: #{tpu_custom_call.1} parent=5 // pred_region
        %s208 = ssub.s32 %s19, 1
        %s209 = sand.u32 %s53, 1
        %s210 = scalar_lea.sflag [#allocation4], %s209
        %s211 = sand.u32 %s53, 1
        %s212 = smul.addr %s211, 128
        %s213 = scalar_lea.vmem [#allocation3], %s212
        // Predicated region
        $region33: #{tpu_custom_call.1} parent=31 // pred_check
          %p214 = pneg %p66
        $region34: #{tpu_custom_call.1} parent=31 // pred_check_branch
          %216 = sbr.rel (%p214) target = $region36
        $region35: #{tpu_custom_call.1} parent=31 // pred_region
          %218 = dma.done %s210, 2048
        $region36: #{tpu_custom_call.1} parent=31 // pred_fallthru
          _
        %s219 = sand.u32 %s79, 1
        %s220 = scalar_lea.sflag [#allocation7], %s219
        %s221 = sand.u32 %s79, 1
        %s222 = smul.addr %s221, 128
        %s223 = scalar_lea.vmem [#allocation6], %s222
        // Predicated region
        $region37: #{tpu_custom_call.1} parent=31 // pred_check
          %p224 = pneg %p92
        $region38: #{tpu_custom_call.1} parent=31 // pred_check_branch
          %226 = sbr.rel (%p224) target = $region40
        $region39: #{tpu_custom_call.1} parent=31 // pred_region
          %228 = dma.done %s220, 2048
        $region40: #{tpu_custom_call.1} parent=31 // pred_fallthru
          _
        %p229 = pneg %p40
        %p230 = pneg %p37
        %s231 = sand.u32 %s53, 1
        %s232 = scalar_lea.sflag [#allocation4], %s231
        %s233 = sand.u32 %s53, 1
        %s234 = smul.addr %s233, 128
        %s235 = scalar_lea.vmem [#allocation3], %s234
        %p236 = pneg %p66
        %p237 = pneg %p63
        %s238 = sand.u32 %s79, 1
        %s239 = scalar_lea.sflag [#allocation7], %s238
        %s240 = sand.u32 %s79, 1
        %s241 = smul.addr %s240, 128
        %s242 = scalar_lea.vmem [#allocation6], %s241
        %p243 = pneg %p92
        %p244 = pneg %p89
        %p245 = pneg %p118
        %p246 = pneg %p115
        %s247 = sand.u32 %s105, 1
        %s248 = scalar_lea.sflag [#allocation5], %s247
        %s249 = sand.u32 %s105, 1
        %s250 = smul.addr %s249, 128
        %s251 = scalar_lea.vmem [#allocation8], %s250
        %s252 = smul.u32 2, %s24
        %s253 = ssub.s32 3, %s252
        %p254 = scmp.lt.s32.totalorder %s253, 2
        %s255 = scalar_select %p254, %s253, 2
        %s256 = smul.u32 8, %s255
        %s257 = smul.u32 %s256, 8
        %s258 = smul.u32 2, %s24
        %s259 = ssub.s32 3, %s258
        %p260 = scmp.lt.s32.totalorder %s259, 2
        %s261 = scalar_select %p260, %s259, 2
        %s262 = smul.u32 8, %s261
        %s263 = smul.u32 %s262, 8
        %s264 = smul.u32 2, %s24
        %s265 = ssub.s32 3, %s264
        %p266 = scmp.lt.s32.totalorder %s265, 2
        %s267 = scalar_select %p266, %s265, 2
        %s268 = smul.u32 8, %s267
        %s269 = smul.u32 %s268, 8
        %s270 = sld [smem:[#allocation2]]
        %v271 = vld [vmem:[%s213] sm:$0xff]
        %v272 = vld [vmem:[%s213 + $0x8] sm:$0xff]
        %v273 = vld [vmem:[%s213 + $0x10] sm:$0xff]
        %v274 = vld [vmem:[%s213 + $0x18] sm:$0xff]
        %v275 = vld [vmem:[%s213 + $0x20] sm:$0xff]
        %v276 = vld [vmem:[%s213 + $0x28] sm:$0xff]
        %v277 = vld [vmem:[%s213 + $0x30] sm:$0xff]
        %v278 = vld [vmem:[%s213 + $0x38] sm:$0xff]
        %v279 = vld [vmem:[%s213 + $0x40] sm:$0xff]
        %v280 = vld [vmem:[%s213 + $0x48] sm:$0xff]
        %v281 = vld [vmem:[%s213 + $0x50] sm:$0xff]
        %v282 = vld [vmem:[%s213 + $0x58] sm:$0xff]
        %v283 = vld [vmem:[%s213 + $0x60] sm:$0xff]
        %v284 = vld [vmem:[%s213 + $0x68] sm:$0xff]
        %v285 = vld [vmem:[%s213 + $0x70] sm:$0xff]
        %v286 = vld [vmem:[%s213 + $0x78] sm:$0xff]
        %v287 = vld [vmem:[%s223] sm:$0xff]
        %v288 = vld [vmem:[%s223 + $0x8] sm:$0xff]
        %v289 = vld [vmem:[%s223 + $0x10] sm:$0xff]
        %v290 = vld [vmem:[%s223 + $0x18] sm:$0xff]
        %v291 = vld [vmem:[%s223 + $0x20] sm:$0xff]
        %v292 = vld [vmem:[%s223 + $0x28] sm:$0xff]
        %v293 = vld [vmem:[%s223 + $0x30] sm:$0xff]
        %v294 = vld [vmem:[%s223 + $0x38] sm:$0xff]
        %v295 = vld [vmem:[%s223 + $0x40] sm:$0xff]
        %v296 = vld [vmem:[%s223 + $0x48] sm:$0xff]
        %v297 = vld [vmem:[%s223 + $0x50] sm:$0xff]
        %v298 = vld [vmem:[%s223 + $0x58] sm:$0xff]
        %v299 = vld [vmem:[%s223 + $0x60] sm:$0xff]
        %v300 = vld [vmem:[%s223 + $0x68] sm:$0xff]
        %v301 = vld [vmem:[%s223 + $0x70] sm:$0xff]
        %v302 = vld [vmem:[%s223 + $0x78] sm:$0xff]
        %v303 = vstv %s270
        %v304 = vmul.f32 %v287, %v303
        %v305 = vmul.f32 %v288, %v303
        %v306 = vmul.f32 %v289, %v303
        %v307 = vmul.f32 %v290, %v303
        %v308 = vmul.f32 %v291, %v303
        %v309 = vmul.f32 %v292, %v303
        %v310 = vmul.f32 %v293, %v303
        %v311 = vmul.f32 %v294, %v303
        %v312 = vmul.f32 %v295, %v303
        %v313 = vmul.f32 %v296, %v303
        %v314 = vmul.f32 %v297, %v303
        %v315 = vmul.f32 %v298, %v303
        %v316 = vmul.f32 %v299, %v303
        %v317 = vmul.f32 %v300, %v303
        %v318 = vmul.f32 %v301, %v303
        %v319 = vmul.f32 %v302, %v303
        %v320 = vadd.f32 %v271, %v304
        %v321 = vadd.f32 %v272, %v305
        %v322 = vadd.f32 %v273, %v306
        %v323 = vadd.f32 %v274, %v307
        %v324 = vadd.f32 %v275, %v308
        %v325 = vadd.f32 %v276, %v309
        %v326 = vadd.f32 %v277, %v310
        %v327 = vadd.f32 %v278, %v311
        %v328 = vadd.f32 %v279, %v312
        %v329 = vadd.f32 %v280, %v313
        %v330 = vadd.f32 %v281, %v314
        %v331 = vadd.f32 %v282, %v315
        %v332 = vadd.f32 %v283, %v316
        %v333 = vadd.f32 %v284, %v317
        %v334 = vadd.f32 %v285, %v318
        %v335 = vadd.f32 %v286, %v319
        %336 = vst [vmem:[%s251] sm:$0xff] %v320
        %337 = vst [vmem:[%s251 + $0x8] sm:$0xff] %v321
        %338 = vst [vmem:[%s251 + $0x10] sm:$0xff] %v322
        %339 = vst [vmem:[%s251 + $0x18] sm:$0xff] %v323
        %340 = vst [vmem:[%s251 + $0x20] sm:$0xff] %v324
        %341 = vst [vmem:[%s251 + $0x28] sm:$0xff] %v325
        %342 = vst [vmem:[%s251 + $0x30] sm:$0xff] %v326
        %343 = vst [vmem:[%s251 + $0x38] sm:$0xff] %v327
        %344 = vst [vmem:[%s251 + $0x40] sm:$0xff] %v328
        %345 = vst [vmem:[%s251 + $0x48] sm:$0xff] %v329
        %346 = vst [vmem:[%s251 + $0x50] sm:$0xff] %v330
        %347 = vst [vmem:[%s251 + $0x58] sm:$0xff] %v331
        %348 = vst [vmem:[%s251 + $0x60] sm:$0xff] %v332
        %349 = vst [vmem:[%s251 + $0x68] sm:$0xff] %v333
        %350 = vst [vmem:[%s251 + $0x70] sm:$0xff] %v334
        %351 = vst [vmem:[%s251 + $0x78] sm:$0xff] %v335
        %s352 = sand.u32 %s105, 1
        %s353 = scalar_lea.sflag [#allocation5], %s352
        %s354 = sand.u32 %s105, 1
        %s355 = smul.addr %s354, 128
        %s356 = scalar_lea.vmem [#allocation8], %s355
        // Predicated region
        $region41: #{tpu_custom_call.1} parent=31 // pred_check
          %p357 = pneg %p115
        $region42: #{tpu_custom_call.1} parent=31 // pred_check_branch
          %359 = sbr.rel (%p357) target = $region44
        $region43: #{tpu_custom_call.1} parent=31 // pred_region
          %s360 = smul.u32 2, %s24
          %s361 = ssub.s32 3, %s360
          %p362 = scmp.lt.s32.totalorder %s361, 2
          %s363 = scalar_select %p362, %s361, 2
          %s364 = smul.u32 8, %s363
          %s365 = smul.u32 %s364, 8
          %s366 = ssub.s32 128, %s365
          %s367 = sshll.u32 %s366, 4
          %368 = vsyncadd %s353, %s367
          %p369 = scmp.ne.s32.totalorder 0, %s365
          %s370 = smul.addr %s360, 8
          %s371 = smul.addr %s370, 8
          %s372 = scalar_lea.hbm %s3, %s371
          %s373 = smul.u32 64, %s363
          %s374 = sshll.u32 %s356, 4
          %s375 = int_to_ptr.vmem [resolvable:$true] %s374
          %s376 = sshll.u32 %s372, 4
          %s377 = int_to_ptr.hbm [resolvable:$true] %s376
          %s378 = sshll.u32 %s373, 4
          %382 = dma.vmem_to_hbm [thread:$0]  (%p369), %s375, %s378, %s377, %s353, 1024, 1024, 64
        $region44: #{tpu_custom_call.1} parent=31 // pred_fallthru
          _
      $region32: #{tpu_custom_call.1} parent=5 // pred_fallthru
        _
      %p383 = scmp.le.s32.totalorder 2, %s19
      // Predicated region
      $region45: #{tpu_custom_call.1} parent=5 // pred_check
        %p384 = pneg %p383
      $region46: #{tpu_custom_call.1} parent=5 // pred_check_branch
        %386 = sbr.rel (%p384) target = $region48
      $region47: #{tpu_custom_call.1} parent=5 // pred_region
        %s387 = ssub.s32 %s19, 2
        // Predicated region
        $region49: #{tpu_custom_call.1} parent=47 // pred_check
          %p388 = pneg %p121
        $region50: #{tpu_custom_call.1} parent=47 // pred_check_branch
          %390 = sbr.rel (%p388) target = $region52
        $region51: #{tpu_custom_call.1} parent=47 // pred_region
          %s391 = sand.u32 %s106, 1
          %s392 = scalar_lea.sflag [#allocation5], %s391
          %s393 = sand.u32 %s106, 1
          %s394 = smul.addr %s393, 128
          %s395 = scalar_lea.vmem [#allocation8], %s394
          %397 = dma.done %s392, 2048
        $region52: #{tpu_custom_call.1} parent=47 // pred_fallthru
          _
      $region48: #{tpu_custom_call.1} parent=5 // pred_fallthru
        _
    $region6: #{tpu_custom_call.1} parent=1 // loop_footer
      %s23 = sadd.s32 1, %s19
    $region7: #{tpu_custom_call.1} parent=1 // loop_footer_branch
      %18 = sbr.rel target = $region3
    $region8: #{tpu_custom_call.1} parent=1 // loop_exit
      _
    %398 = vsyncpa [#allocation4], 1
    %s399 = scalar_lea.sflag [#allocation4], 1
    %400 = vsyncpa %s399, 1
    %401 = vsyncpa [#allocation7], 1
    %s402 = scalar_lea.sflag [#allocation7], 1
    %403 = vsyncpa %s402, 1
    %404 = vsyncpa [#allocation5], 1
    %s405 = scalar_lea.sflag [#allocation5], 1
    %406 = vsyncpa %s405, 1

</llo_original>
